<compile_context>
chip_gen: v7x
topology: tpu7x:2x2x1
jax: 0.10.0
libtpu: 0.0.40
codegen_flags: <defaults>
</compile_context>

<pallas_src>
import functools

import numpy as np
import jax
import jax.numpy as jnp
from jax.experimental import pallas as pl
from jax.experimental.pallas import tpu as pltpu

F_IN = 8           # n_features
REP = 10           # pre_treatment_rep_size
H1 = 25            # hidden width
N_OUT = 1          # n_outputs
D = 64             # padded hidden width of the fused network (2*H1 + REP = 60 <= 64)
IN_W = 16          # padded input width:  [x(8), t(1), 1(1), 0*6]
OUT_W = 16         # padded output width: [rep(10), yt(1), yc(1), 0*4]
N_LAYERS = 5
ONE_COL = F_IN + 1     # constant-1 column in the input slab (col 9)
BIAS_COL = D - 1       # constant-1 carrier column in the hidden layers (col 63)
DEFAULT_BM = 2048      # max batch tile (rows per grid step)


def _round_up(n, m):
    return ((n + m - 1) // m) * m


# --------------------------------------------------------------------------
# Kernel: 5 fused layers, one bf16 weight slab, biases folded into the slab.
# --------------------------------------------------------------------------
def tarnet_kernel(xt_ref, w_ref, out_ref):
    # xt_ref: [BM, 16] f32   w_ref: [5, 64, 64] bf16   out_ref: [BM, 16] f32
    h = xt_ref[...]
    # layer 0: [BM,16] @ [16,64] -- slice the ref so only 16 rows are loaded.
    w0 = w_ref[0, :IN_W, :]
    h = jnp.dot(h.astype(jnp.bfloat16), w0, preferred_element_type=jnp.float32)
    h = jnp.maximum(h, 0.0)
    # layers 1..3 (ReLU), layer 4 (linear); bias is carried by column BIAS_COL.
    for k in range(1, N_LAYERS - 1):
        h = jnp.dot(h.astype(jnp.bfloat16), w_ref[k],
                    preferred_element_type=jnp.float32)
        h = jnp.maximum(h, 0.0)
    h = jnp.dot(h.astype(jnp.bfloat16), w_ref[N_LAYERS - 1],
                preferred_element_type=jnp.float32)
    # columns: 0:10 = rep, 10 = yt, 11 = yc, 12:16 = 0
    out_ref[...] = h[:, :OUT_W]


# --------------------------------------------------------------------------
# Host-side weight packing: fold pre-treatment, both heads (block-diagonal),
# the rep/t passthroughs AND the biases (via a constant-1 column) into one
# bf16 [5, 64, 64] slab.
# --------------------------------------------------------------------------
def pack_params(params):
    (w1, b1, w2, b2,
     wt1, bt1, wt2, bt2, wt3, bt3,
     wc1, bc1, wc2, bc2, wc3, bc3) = [np.asarray(p, np.float32) for p in params]

    W = np.zeros((N_LAYERS, D, D), np.float32)
    eye = np.eye(REP, dtype=np.float32)

    # layer 0: [x(8), t(1), 1(1)] -> [h1(25), t(@25), 1(@63)]
    W[0, :F_IN, :H1] = w1
    W[0, F_IN, H1] = 1.0                 # t passthrough (t in {0,1}, ReLU-safe)
    W[0, ONE_COL, :H1] = b1[0]           # bias via constant-1 input column
    W[0, ONE_COL, BIAS_COL] = 1.0        # carry the constant 1 forward

    # layer 1: -> [rep(10), t(@10), 1(@63)]
    W[1, :H1, :REP] = w2
    W[1, H1, REP] = 1.0                  # t passthrough
    W[1, BIAS_COL, :REP] = b2[0]
    W[1, BIAS_COL, BIAS_COL] = 1.0

    # layer 2: [rep(10), t(1)] -> [a_t(0:25), a_c(25:50), rep(50:60), 1(@63)]
    W[2, :REP + 1, :H1] = wt1
    W[2, :REP + 1, H1:2 * H1] = wc1
    W[2, :REP, 2 * H1:2 * H1 + REP] = eye        # rep passthrough (rep >= 0)
    W[2, BIAS_COL, :H1] = bt1[0]
    W[2, BIAS_COL, H1:2 * H1] = bc1[0]
    W[2, BIAS_COL, BIAS_COL] = 1.0

    # layer 3: block-diagonal heads, layer 2
    W[3, :H1, :H1] = wt2
    W[3, H1:2 * H1, H1:2 * H1] = wc2
    W[3, 2 * H1:2 * H1 + REP, 2 * H1:2 * H1 + REP] = eye
    W[3, BIAS_COL, :H1] = bt2[0]
    W[3, BIAS_COL, H1:2 * H1] = bc2[0]
    W[3, BIAS_COL, BIAS_COL] = 1.0

    # layer 4 (no ReLU): -> [rep(0:10), yt(@10), yc(@11)]
    W[4, :H1, REP] = wt3[:, 0]
    W[4, H1:2 * H1, REP + 1] = wc3[:, 0]
    W[4, 2 * H1:2 * H1 + REP, :REP] = eye
    W[4, BIAS_COL, REP] = bt3[0, 0]
    W[4, BIAS_COL, REP + 1] = bc3[0, 0]

    # bf16 operands: MXU-native on v5e/v6e/v7x (do NOT go to fp8 on v7x).
    return jnp.asarray(W, dtype=jnp.bfloat16)


# --------------------------------------------------------------------------
# Jitted wrapper: slab assembly + pallas_call + output slicing fuse into one
# XLA program (no eager HBM round-trips around a microsecond-scale kernel).
# --------------------------------------------------------------------------
@functools.partial(jax.jit, static_argnames=("bm",))
def _tarnet_pallas(W, x, t, *, bm):
    n = x.shape[0]

    # v7x has 2 TensorCores: cap the tile at ceil(n/2) (8-aligned) so the
    # "parallel" grid always has >= 2 steps for any non-trivial batch.
    half = _round_up(max(1, -(-n // 2)), 8)
    bm_eff = max(8, min(bm, half))
    n_pad = _round_up(n, bm_eff)
    grid = (n_pad // bm_eff,)

    # Single lane-dense input slab: [x(8) | t | 1 | zero-pad] -> [N_pad, 16].
    # Padded rows have 0 in the constant-1 column, so their outputs are 0.
    xt = jnp.zeros((n_pad, IN_W), jnp.float32)
    xt = xt.at[:n, :F_IN].set(x.astype(jnp.float32))
    xt = xt.at[:n, F_IN].set(t.reshape(-1).astype(jnp.float32))
    xt = xt.at[:n, ONE_COL].set(1.0)

    out = pl.pallas_call(
        tarnet_kernel,
        out_shape=jax.ShapeDtypeStruct((n_pad, OUT_W), jnp.float32),
        grid_spec=pltpu.PrefetchScalarGridSpec(
            num_scalar_prefetch=0,
            grid=grid,
            in_specs=[
                pl.BlockSpec((bm_eff, IN_W), lambda i: (i, 0)),
                # Weight slab is grid-invariant (constant index_map); Pallas
                # skips the re-fetch, and the duplicate pipeline buffer is
                # only ~40 KiB so no special pipeline_mode is needed.
                pl.BlockSpec((N_LAYERS, D, D), lambda i: (0, 0, 0)),
            ],
            out_specs=pl.BlockSpec((bm_eff, OUT_W), lambda i: (i, 0)),
        ),
        compiler_params=pltpu.CompilerParams(
            dimension_semantics=("parallel",)),
    )(xt, W)

    rep = out[:n, :REP]
    yt_all = out[:n, REP:REP + 1]
    yc_all = out[:n, REP + 1:REP + 2]
    return rep, yt_all, yc_all


def tarnet_forward_all_rows(params, x, t, *, bm=DEFAULT_BM):
    """Runs the Pallas kernel; returns (rep[N,10], yt_all[N,1], yc_all[N,1])."""
    W = pack_params(params)
    return _tarnet_pallas(W, x, t, bm=bm)


def init_params(key):
    """Deterministic init; weights stored as [in, out] (transposed vs PyTorch)."""
    def linear(key, fan_in, fan_out):
        kw, kb = jax.random.split(key)
        bound = 1.0 / np.sqrt(fan_in)
        w = jax.random.uniform(kw, (fan_in, fan_out), jnp.float32, -bound, bound)
        b = jax.random.uniform(kb, (1, fan_out), jnp.float32, -bound, bound)
        return w, b

    keys = jax.random.split(key, 8)
    w1, b1 = linear(keys[0], F_IN, H1)          # pre: Linear(F, 25)
    w2, b2 = linear(keys[1], H1, REP)           # pre: Linear(25, 10)
    wt1, bt1 = linear(keys[2], REP + 1, H1)     # treated head: Linear(11, 25)
    wt2, bt2 = linear(keys[3], H1, H1)          # treated head: Linear(25, 25)
    wt3, bt3 = linear(keys[4], H1, N_OUT)       # treated head: Linear(25, 1)
    wc1, bc1 = linear(keys[5], REP + 1, H1)     # control head: Linear(11, 25)
    wc2, bc2 = linear(keys[6], H1, H1)          # control head: Linear(25, 25)
    wc3, bc3 = linear(keys[7], H1, N_OUT)       # control head: Linear(25, 1)
    return (w1, b1, w2, b2,
            wt1, bt1, wt2, bt2, wt3, bt3,
            wc1, bc1, wc2, bc2, wc3, bc3)


def tarnet_forward(params, x, t):
    """Full TARNet.forward: returns dict with 'pre_treatment_rep', 'yt', 'yc'.

    The boolean subset selection has a dynamic output shape, so it is done
    host-side on the per-row head outputs (numerically identical).
    Contract: t must be binary {0, 1} (required by the ReLU passthroughs)."""
    t_np = np.asarray(t).reshape(-1)
    assert np.all((t_np == 0.0) | (t_np == 1.0)), "t must be binary {0,1}"
    rep, yt_all, yc_all = jax.tree.map(
        jax.block_until_ready, tarnet_forward_all_rows(params, x, t))
    treated = t_np == 1.0
    control = t_np == 0.0
    return {
        "pre_treatment_rep": rep,
        "yt": np.asarray(yt_all)[treated, :],
        "yc": np.asarray(yc_all)[control, :],
    }


def _reference(params, x, t):
    (w1, b1, w2, b2,
     wt1, bt1, wt2, bt2, wt3, bt3,
     wc1, bc1, wc2, bc2, wc3, bc3) = params
    h = jnp.maximum(x @ w1 + b1, 0.0)
    rep = jnp.maximum(h @ w2 + b2, 0.0)
    s = jnp.concatenate([rep, t], axis=1)

    def head(s, w1, b1, w2, b2, w3, b3):
        a = jnp.maximum(s @ w1 + b1, 0.0)
        a = jnp.maximum(a @ w2 + b2, 0.0)
        return a @ w3 + b3

    return rep, head(s, wt1, bt1, wt2, bt2, wt3, bt3), head(s, wc1, bc1, wc2, bc2, wc3, bc3)


if __name__ == "__main__":
    key = jax.random.PRNGKey(0)
    kx, kt, kp = jax.random.split(key, 3)

    N = 16
    x = jax.random.normal(kx, (N, F_IN), jnp.float32)
    t = (jax.random.uniform(kt, (N, 1)) > 0.5).astype(jnp.float32)

    params = init_params(kp)

    out = tarnet_forward(params, x, t)

    # Sanity check against a pure-f32 JAX reference of the same math.
    # Tolerance loosened because matmul operands are bf16 on the MXU.
    rep_ref, yt_all_ref, yc_all_ref = _reference(params, x, t)
    t_np = np.asarray(t).reshape(-1)
    np.testing.assert_allclose(out["pre_treatment_rep"], rep_ref, rtol=3e-2, atol=3e-2)
    np.testing.assert_allclose(out["yt"], np.asarray(yt_all_ref)[t_np == 1.0],
                               rtol=3e-2, atol=3e-2)
    np.testing.assert_allclose(out["yc"], np.asarray(yc_all_ref)[t_np == 0.0],
                               rtol=3e-2, atol=3e-2)

    assert out["pre_treatment_rep"].shape == (N, REP)
    assert out["yt"].shape == (int((t_np == 1.0).sum()), N_OUT)
    assert out["yc"].shape == (int((t_np == 0.0).sum()), N_OUT)

    print("KERNEL_OK")
</pallas_src>

<mosaic_0001>
module attributes {stable_mosaic.version = 11 : i64} {
  func.func @tarnet_kernel(%arg0: i32, %arg1: memref<8x16xf32, #tpu.memory_space<vmem>>, %arg2: memref<5x64x64xbf16, #tpu.memory_space<vmem>>, %arg3: memref<8x16xf32, #tpu.memory_space<vmem>>) attributes {dimension_semantics = [#tpu.dimension_semantics<parallel>], iteration_bounds = array<i64: 2>, scalar_prefetch = 0 : i64, scratch_operands = 0 : i64, tpu.core_type = #tpu.core_type<tc>, window_params = [{transform_indices = @transform_0, window_bounds = array<i64: 8, 16>}, {pipeline_mode = #tpu.pipeline_mode<synchronous>, transform_indices = @transform_1, window_bounds = array<i64: 5, 64, 64>}, {transform_indices = @transform_2, window_bounds = array<i64: 8, 16>}]} {
    %c0 = arith.constant 0 : index
    %c0_0 = arith.constant 0 : index
    %0 = vector.load %arg1[%c0, %c0_0] : memref<8x16xf32, #tpu.memory_space<vmem>>, vector<8x16xf32>
    %c0_1 = arith.constant 0 : index
    %c0_2 = arith.constant 0 : index
    %c0_3 = arith.constant 0 : index
    %1 = vector.load %arg2[%c0_1, %c0_2, %c0_3] : memref<5x64x64xbf16, #tpu.memory_space<vmem>>, vector<1x16x64xbf16>
    %2 = vector.shape_cast %1 : vector<1x16x64xbf16> to vector<16x64xbf16>
    %3 = arith.truncf %0 : vector<8x16xf32> to vector<8x16xbf16>
    %cst = arith.constant dense<0.000000e+00> : vector<8x64xf32>
    %4 = tpu.matmul %3, %2, %cst {dimension_numbers = #tpu.dot_dimension_numbers<[1], [0], [0], [1], [0, 0, 1, 1], [], []>} : vector<8x16xbf16>, vector<16x64xbf16>, vector<8x64xf32> -> vector<8x64xf32>
    %cst_4 = arith.constant 0.000000e+00 : f32
    %5 = vector.broadcast %cst_4 : f32 to vector<8x64xf32>
    %6 = arith.maximumf %4, %5 : vector<8x64xf32>
    %7 = arith.truncf %6 : vector<8x64xf32> to vector<8x64xbf16>
    %c1 = arith.constant 1 : index
    %c0_5 = arith.constant 0 : index
    %c0_6 = arith.constant 0 : index
    %8 = vector.load %arg2[%c1, %c0_5, %c0_6] : memref<5x64x64xbf16, #tpu.memory_space<vmem>>, vector<1x64x64xbf16>
    %9 = vector.shape_cast %8 : vector<1x64x64xbf16> to vector<64x64xbf16>
    %cst_7 = arith.constant dense<0.000000e+00> : vector<8x64xf32>
    %10 = tpu.matmul %7, %9, %cst_7 {dimension_numbers = #tpu.dot_dimension_numbers<[1], [0], [0], [1], [0, 0, 1, 1], [], []>} : vector<8x64xbf16>, vector<64x64xbf16>, vector<8x64xf32> -> vector<8x64xf32>
    %cst_8 = arith.constant 0.000000e+00 : f32
    %11 = vector.broadcast %cst_8 : f32 to vector<8x64xf32>
    %12 = arith.maximumf %10, %11 : vector<8x64xf32>
    %13 = arith.truncf %12 : vector<8x64xf32> to vector<8x64xbf16>
    %c2 = arith.constant 2 : index
    %c0_9 = arith.constant 0 : index
    %c0_10 = arith.constant 0 : index
    %14 = vector.load %arg2[%c2, %c0_9, %c0_10] : memref<5x64x64xbf16, #tpu.memory_space<vmem>>, vector<1x64x64xbf16>
    %15 = vector.shape_cast %14 : vector<1x64x64xbf16> to vector<64x64xbf16>
    %cst_11 = arith.constant dense<0.000000e+00> : vector<8x64xf32>
    %16 = tpu.matmul %13, %15, %cst_11 {dimension_numbers = #tpu.dot_dimension_numbers<[1], [0], [0], [1], [0, 0, 1, 1], [], []>} : vector<8x64xbf16>, vector<64x64xbf16>, vector<8x64xf32> -> vector<8x64xf32>
    %cst_12 = arith.constant 0.000000e+00 : f32
    %17 = vector.broadcast %cst_12 : f32 to vector<8x64xf32>
    %18 = arith.maximumf %16, %17 : vector<8x64xf32>
    %19 = arith.truncf %18 : vector<8x64xf32> to vector<8x64xbf16>
    %c3 = arith.constant 3 : index
    %c0_13 = arith.constant 0 : index
    %c0_14 = arith.constant 0 : index
    %20 = vector.load %arg2[%c3, %c0_13, %c0_14] : memref<5x64x64xbf16, #tpu.memory_space<vmem>>, vector<1x64x64xbf16>
    %21 = vector.shape_cast %20 : vector<1x64x64xbf16> to vector<64x64xbf16>
    %cst_15 = arith.constant dense<0.000000e+00> : vector<8x64xf32>
    %22 = tpu.matmul %19, %21, %cst_15 {dimension_numbers = #tpu.dot_dimension_numbers<[1], [0], [0], [1], [0, 0, 1, 1], [], []>} : vector<8x64xbf16>, vector<64x64xbf16>, vector<8x64xf32> -> vector<8x64xf32>
    %cst_16 = arith.constant 0.000000e+00 : f32
    %23 = vector.broadcast %cst_16 : f32 to vector<8x64xf32>
    %24 = arith.maximumf %22, %23 : vector<8x64xf32>
    %25 = arith.truncf %24 : vector<8x64xf32> to vector<8x64xbf16>
    %c4 = arith.constant 4 : index
    %c0_17 = arith.constant 0 : index
    %c0_18 = arith.constant 0 : index
    %26 = vector.load %arg2[%c4, %c0_17, %c0_18] : memref<5x64x64xbf16, #tpu.memory_space<vmem>>, vector<1x64x64xbf16>
    %27 = vector.shape_cast %26 : vector<1x64x64xbf16> to vector<64x64xbf16>
    %cst_19 = arith.constant dense<0.000000e+00> : vector<8x64xf32>
    %28 = tpu.matmul %25, %27, %cst_19 {dimension_numbers = #tpu.dot_dimension_numbers<[1], [0], [0], [1], [0, 0, 1, 1], [], []>} : vector<8x64xbf16>, vector<64x64xbf16>, vector<8x64xf32> -> vector<8x64xf32>
    %29 = vector.extract_strided_slice %28 {offsets = [0, 0], sizes = [8, 16], strides = [1, 1]} : vector<8x64xf32> to vector<8x16xf32>
    %c0_20 = arith.constant 0 : index
    %c0_21 = arith.constant 0 : index
    %30 = vector.load %arg3[%c0_20, %c0_21] : memref<8x16xf32, #tpu.memory_space<vmem>>, vector<8x16xf32>
    tpu.vector_store %arg3[%c0_20, %c0_21], %29 {strides = array<i32>} : memref<8x16xf32, #tpu.memory_space<vmem>>, vector<8x16xf32>,
    return
  }
  func.func @transform_0(%arg0: i32) -> (i32, i32) {
    %c0_i32 = arith.constant 0 : i32
    %c0_i32_0 = arith.constant 0 : i32
    return %arg0, %c0_i32 : i32, i32
  }
  func.func @transform_1(%arg0: i32) -> (i32, i32, i32) {
    %c0_i32 = arith.constant 0 : i32
    %c0_i32_0 = arith.constant 0 : i32
    %c0_i32_1 = arith.constant 0 : i32
    %c0_i32_2 = arith.constant 0 : i32
    return %c0_i32, %c0_i32_0, %c0_i32_1 : i32, i32, i32
  }
  func.func @transform_2(%arg0: i32) -> (i32, i32) {
    %c0_i32 = arith.constant 0 : i32
    %c0_i32_0 = arith.constant 0 : i32
    return %arg0, %c0_i32 : i32, i32
  }
}

</mosaic_0001>

<llo_original>
// kernel: _tarnet_pallas.1
$region0: #{_tarnet_pallas.1}
  #allocation0 [shape = 'u32[]', space=smem, size = 0x4, offset = 0x4, fixed_abs, tag = 'smem constant byte address 0x4 - core index']
  #allocation1 [shape = 'u32[144,128]{1,0:T(1,128)}', space=vmem, size = 0x12000, scoped, tag = 'internal scratch']
  %s0 = inlined_call_operand.vmem [shape: f32[16,16], index: 0, kind: input, shape index: {}]
  %s1 = inlined_call_operand.vmem [shape: bf16[5,64,64], index: 1, kind: input, shape index: {}]
  %s2 = inlined_call_operand.vmem [shape: f32[16,16], index: 2, kind: output, shape index: {}]
  %s3 = sld [smem:[#allocation0]]
  $region41: #{_tarnet_pallas.1} parent=0
    _
  %s5 = ssub.s32 1, %s3
  %s6 = scalar_select 0, %s5, %s3
  loop: start=0, step=1, limit=4
  $region2: #{_tarnet_pallas.1} parent=0 // loop_pre_header
    _
  $region3: #{_tarnet_pallas.1} parent=0 // loop_header
    %s8 = sphi 0, %s12
    %p9 = scmp.ge.s32.totalorder %s8, 4
    %s18 = sphi 0, %s20
    %s21 = sphi 0, %s18
    %s22 = sphi 0, %s21
    %s38 = sphi 0, %s22
    %s42 = sphi 0, %s42
    %s44 = sphi 0, %s42
    %s45 = sphi 0, %s44
    %s59 = sphi 0, %s45
    %s65 = sphi 0, %s67
    %s68 = sphi 0, %s65
    %s69 = sphi 0, %s68
    %s85 = sphi 0, %s69
  $region4: #{_tarnet_pallas.1} parent=0 // loop_header_branch
    %11 = sbr.rel (%p9) target = $region8
  $region5: #{_tarnet_pallas.1} parent=0 // loop_body
    %s13 = ssub.s32 %s8, 1
    %s14 = ssub.s32 %s8, 2
    %s15 = sadd.s32 %s8, 1
    %s16 = ssub.s32 %s8, %s15
    %p17 = scmp.eq.s32.totalorder %s16, 0
    %s19 = sadd.s32 %s18, 1
    %s20 = scalar_select %p17, %s18, %s19
    %p23 = pneg %p17
    %p24 = scmp.eq.s32.totalorder %s8, 1
    %p25 = por %p23, %p24
    %p26 = scmp.ne.s32.totalorder %s18, %s21
    %p27 = scmp.eq.s32.totalorder %s8, 0
    %p28 = por %p26, %p27
    %p29 = scmp.ne.s32.totalorder %s18, %s21
    %p30 = scmp.eq.s32.totalorder %s13, 1
    %p31 = por %p29, %p30
    %p32 = scmp.ne.s32.totalorder %s21, %s22
    %p33 = scmp.eq.s32.totalorder %s13, 0
    %p34 = por %p32, %p33
    %p35 = scmp.ne.s32.totalorder %s21, %s22
    %p36 = scmp.eq.s32.totalorder %s14, 1
    %p37 = por %p35, %p36
    %p39 = scmp.ne.s32.totalorder %s22, %s38
    %p40 = scmp.eq.s32.totalorder %s14, 0
    %p41 = por %p39, %p40
    %s43 = sadd.s32 %s42, 1
    %p46 = scmp.eq.s32.totalorder %s8, 1
    %p47 = scmp.ne.s32.totalorder %s42, %s44
    %p48 = scmp.eq.s32.totalorder %s8, 0
    %p49 = por %p47, %p48
    %p50 = scmp.ne.s32.totalorder %s42, %s44
    %p51 = scmp.eq.s32.totalorder %s13, 1
    %p52 = por %p50, %p51
    %p53 = scmp.ne.s32.totalorder %s44, %s45
    %p54 = scmp.eq.s32.totalorder %s13, 0
    %p55 = por %p53, %p54
    %p56 = scmp.ne.s32.totalorder %s44, %s45
    %p57 = scmp.eq.s32.totalorder %s14, 1
    %p58 = por %p56, %p57
    %p60 = scmp.ne.s32.totalorder %s45, %s59
    %p61 = scmp.eq.s32.totalorder %s14, 0
    %p62 = por %p60, %p61
    %s63 = ssub.s32 %s8, %s15
    %p64 = scmp.eq.s32.totalorder %s63, 0
    %s66 = sadd.s32 %s65, 1
    %s67 = scalar_select %p64, %s65, %s66
    %p70 = pneg %p64
    %p71 = scmp.eq.s32.totalorder %s8, 1
    %p72 = por %p70, %p71
    %p73 = scmp.ne.s32.totalorder %s65, %s68
    %p74 = scmp.eq.s32.totalorder %s8, 0
    %p75 = por %p73, %p74
    %p76 = scmp.ne.s32.totalorder %s65, %s68
    %p77 = scmp.eq.s32.totalorder %s13, 1
    %p78 = por %p76, %p77
    %p79 = scmp.ne.s32.totalorder %s68, %s69
    %p80 = scmp.eq.s32.totalorder %s13, 0
    %p81 = por %p79, %p80
    %p82 = scmp.ne.s32.totalorder %s68, %s69
    %p83 = scmp.eq.s32.totalorder %s14, 1
    %p84 = por %p82, %p83
    %p86 = scmp.ne.s32.totalorder %s69, %s85
    %p87 = scmp.eq.s32.totalorder %s14, 0
    %p88 = por %p86, %p87
    %p89 = scmp.le.s32.totalorder 1, %s8
    %p90 = scmp.lt.s32.totalorder %s8, 3
    %p91 = pnand %p89, %p90
    %p92 = pneg %p91
    // Predicated region
    $region9: #{_tarnet_pallas.1} parent=5 // pred_check
      _
    $region10: #{_tarnet_pallas.1} parent=5 // pred_check_branch
      %94 = sbr.rel (%p91) target = $region12
    $region11: #{_tarnet_pallas.1} parent=5 // pred_region
      %s95 = ssub.s32 %s8, 1
      // Predicated region
      $region13: #{_tarnet_pallas.1} parent=11 // pred_check
        %p96 = pneg %p55
      $region14: #{_tarnet_pallas.1} parent=11 // pred_check_branch
        %98 = sbr.rel (%p96) target = $region16
      $region15: #{_tarnet_pallas.1} parent=11 // pred_region
        _
      $region16: #{_tarnet_pallas.1} parent=11 // pred_fallthru
        _
    $region12: #{_tarnet_pallas.1} parent=5 // pred_fallthru
      _
    %p99 = scmp.lt.s32.totalorder %s8, 2
    // Predicated region
    $region17: #{_tarnet_pallas.1} parent=5 // pred_check
      %p100 = pneg %p99
    $region18: #{_tarnet_pallas.1} parent=5 // pred_check_branch
      %102 = sbr.rel (%p100) target = $region20
    $region19: #{_tarnet_pallas.1} parent=5 // pred_region
      // Predicated region
      $region21: #{_tarnet_pallas.1} parent=19 // pred_check
        %p103 = pneg %p28
      $region22: #{_tarnet_pallas.1} parent=19 // pred_check_branch
        %105 = sbr.rel (%p103) target = $region24
      $region23: #{_tarnet_pallas.1} parent=19 // pred_region
        %p106 = scmp.lt.s32.totalorder %s8, 1
        %s107 = scalar_select %p106, %s8, 1
        %s108 = smul.addr %s107, 8
        %s109 = scalar_lea.vmem %s0, %s108
      $region24: #{_tarnet_pallas.1} parent=19 // pred_fallthru
        _
    $region20: #{_tarnet_pallas.1} parent=5 // pred_fallthru
      _
    %p110 = scmp.le.s32.totalorder 1, %s8
    %p111 = scmp.lt.s32.totalorder %s8, 3
    %p112 = pnand %p110, %p111
    %p113 = pneg %p112
    // Predicated region
    $region25: #{_tarnet_pallas.1} parent=5 // pred_check
      _
    $region26: #{_tarnet_pallas.1} parent=5 // pred_check_branch
      %115 = sbr.rel (%p112) target = $region28
    $region27: #{_tarnet_pallas.1} parent=5 // pred_region
      %s116 = ssub.s32 %s8, 1
      %p117 = scmp.lt.s32.totalorder %s13, 1
      %s118 = scalar_select %p117, %s13, 1
      %s119 = smul.addr %s118, 8
      %s120 = scalar_lea.vmem %s0, %s119
      %p121 = pneg %p34
      %p122 = pneg %p31
      %p123 = pneg %p55
      %p124 = pneg %p52
      %p125 = pneg %p81
      %p126 = pneg %p78
      %p127 = scmp.lt.s32.totalorder %s13, 1
      %s128 = scalar_select %p127, %s13, 1
      %s129 = smul.addr %s128, 8
      %s130 = scalar_lea.vmem %s2, %s129
      %p131 = scmp.lt.s32.totalorder %s13, 1
      %s132 = scalar_select %p131, %s13, 1
      %s133 = smul.addr %s132, 8
      %s134 = scalar_lea.vmem %s0, %s133
      %p135 = scmp.lt.s32.totalorder %s13, 1
      %s136 = scalar_select %p135, %s13, 1
      %s137 = smul.addr %s136, 8
      %s138 = scalar_lea.vmem %s2, %s137
      %v140 = vld [vmem:[%s134] sm:$0xff]
      %v141 = vld [vmem:[%s1] sm:$0xf]
      %v142 = vld [vmem:[%s1 + $0x4] sm:$0xf]
      %v143 = vpack.c.bf16 %v140, %v140
      %v146 = vunpack.c.l.b16 %v141
      %v147 = vunpack.c.l.b16 %v142
      %v148 = vpack.c.b16 %v147, %v146
      %vm150 = vcmask 130048
      %v152 = vsel %vm150, %v143, 0
      %154 = vmatprep.subr.bf16.mxu0 0
      %155 = vmatpush1.bf16.msra.mxu0 %v148
      %156 = vmatprep.subr.bf16.mxu0 0
      %157 = vmatpush1.bf16.msra.mxu0 0
      %158 = vmatprep.subr.bf16.mxu0 0
      %159 = vmatpush1.bf16.msra.mxu0 0
      %160 = vmatprep.subr.bf16.mxu0 0
      %161 = vmatpush1.bf16.msra.mxu0 0
      %162 = vmatprep.subr.bf16.mxu0 0
      %163 = vmatpush1.bf16.msra.mxu0 0
      %164 = vmatprep.subr.bf16.mxu0 0
      %165 = vmatpush1.bf16.msra.mxu0 0
      %166 = vmatprep.subr.bf16.mxu0 0
      %167 = vmatpush1.bf16.msra.mxu0 0
      %168 = vmatprep.subr.bf16.mxu0 0
      %169 = vmatpush1.bf16.msra.mxu0 0
      %170 = vmatprep.subr.bf16.mxu0 0
      %171 = vmatpush1.bf16.msra.mxu0 0
      %172 = vmatprep.subr.bf16.mxu0 0
      %173 = vmatpush1.bf16.msra.mxu0 0
      %174 = vmatprep.subr.bf16.mxu0 0
      %175 = vmatpush1.bf16.msra.mxu0 0
      %176 = vmatprep.subr.bf16.mxu0 0
      %177 = vmatpush1.bf16.msra.mxu0 0
      %178 = vmatprep.subr.bf16.mxu0 0
      %179 = vmatpush1.bf16.msra.mxu0 0
      %180 = vmatprep.subr.bf16.mxu0 0
      %181 = vmatpush1.bf16.msra.mxu0 0
      %182 = vmatprep.subr.bf16.mxu0 0
      %183 = vmatpush1.bf16.msra.mxu0 0
      %184 = vmatprep.subr.bf16.mxu0 0
      %185 = vmatpush1.bf16.msra.mxu0 0
      %186 = vmatprep.mubr.bf16.mxu0 0
      %187 = vmatmul.mubr.bf16.gmra.mrb[0].mxu0 %v152
      %v188 = vpop.f32.mrb[0].mxu0
      %v189 = vadd.f32 0.0, %v188
      %v190 = vpop.f32.mrb[0].mxu0
      %v191 = vpop.f32.mrb[0].mxu0
      %v192 = vpop.f32.mrb[0].mxu0
      %193 = vdwg.mxu0
      %v194 = vmax.f32 %v189, 0.0
      %v195 = vpack.c.bf16 %v194, %v194
      %s196 = scalar_lea.vmem %s1, 32
      %v197 = vld [vmem:[%s196] sm:$0xf]
      %v198 = vld [vmem:[%s196 + $0x4] sm:$0xf]
      %v199 = vld [vmem:[%s196 + $0x8] sm:$0xf]
      %v200 = vld [vmem:[%s196 + $0xc] sm:$0xf]
      %v201 = vld [vmem:[%s196 + $0x10] sm:$0xf]
      %v202 = vld [vmem:[%s196 + $0x14] sm:$0xf]
      %v203 = vld [vmem:[%s196 + $0x18] sm:$0xf]
      %v204 = vld [vmem:[%s196 + $0x1c] sm:$0xf]
      %v213 = vunpack.c.l.b16 %v197
      %v214 = vunpack.c.l.b16 %v198
      %v215 = vunpack.c.l.b16 %v199
      %v216 = vunpack.c.l.b16 %v200
      %v217 = vunpack.c.l.b16 %v201
      %v218 = vunpack.c.l.b16 %v202
      %v219 = vunpack.c.l.b16 %v203
      %v220 = vunpack.c.l.b16 %v204
      %v221 = vpack.c.b16 %v214, %v213
      %v222 = vpack.c.b16 %v216, %v215
      %v223 = vpack.c.b16 %v218, %v217
      %v224 = vpack.c.b16 %v220, %v219
      %vm229 = vcmask 523264
      %v231 = vsel %vm229, %v195, 0
      %233 = vmatprep.subr.bf16.mxu0 0
      %234 = vmatpush1.bf16.msra.mxu0 %v221
      %235 = vmatprep.subr.bf16.mxu0 0
      %236 = vmatpush1.bf16.msra.mxu0 %v222
      %237 = vmatprep.subr.bf16.mxu0 0
      %238 = vmatpush1.bf16.msra.mxu0 %v223
      %239 = vmatprep.subr.bf16.mxu0 0
      %240 = vmatpush1.bf16.msra.mxu0 %v224
      %241 = vmatprep.subr.bf16.mxu0 0
      %242 = vmatpush1.bf16.msra.mxu0 0
      %243 = vmatprep.subr.bf16.mxu0 0
      %244 = vmatpush1.bf16.msra.mxu0 0
      %245 = vmatprep.subr.bf16.mxu0 0
      %246 = vmatpush1.bf16.msra.mxu0 0
      %247 = vmatprep.subr.bf16.mxu0 0
      %248 = vmatpush1.bf16.msra.mxu0 0
      %249 = vmatprep.subr.bf16.mxu0 0
      %250 = vmatpush1.bf16.msra.mxu0 0
      %251 = vmatprep.subr.bf16.mxu0 0
      %252 = vmatpush1.bf16.msra.mxu0 0
      %253 = vmatprep.subr.bf16.mxu0 0
      %254 = vmatpush1.bf16.msra.mxu0 0
      %255 = vmatprep.subr.bf16.mxu0 0
      %256 = vmatpush1.bf16.msra.mxu0 0
      %257 = vmatprep.subr.bf16.mxu0 0
      %258 = vmatpush1.bf16.msra.mxu0 0
      %259 = vmatprep.subr.bf16.mxu0 0
      %260 = vmatpush1.bf16.msra.mxu0 0
      %261 = vmatprep.subr.bf16.mxu0 0
      %262 = vmatpush1.bf16.msra.mxu0 0
      %263 = vmatprep.subr.bf16.mxu0 0
      %264 = vmatpush1.bf16.msra.mxu0 0
      %265 = vmatprep.mubr.bf16.mxu0 0
      %266 = vmatmul.mubr.bf16.gmra.mrb[0].mxu0 %v231
      %v267 = vpop.f32.mrb[0].mxu0
      %v268 = vadd.f32 0.0, %v267
      %v269 = vpop.f32.mrb[0].mxu0
      %v270 = vpop.f32.mrb[0].mxu0
      %v271 = vpop.f32.mrb[0].mxu0
      %272 = vdwg.mxu0
      %v273 = vmax.f32 %v268, 0.0
      %v274 = vpack.c.bf16 %v273, %v273
      %s275 = scalar_lea.vmem %s1, 64
      %v276 = vld [vmem:[%s275] sm:$0xf]
      %v277 = vld [vmem:[%s275 + $0x4] sm:$0xf]
      %v278 = vld [vmem:[%s275 + $0x8] sm:$0xf]
      %v279 = vld [vmem:[%s275 + $0xc] sm:$0xf]
      %v280 = vld [vmem:[%s275 + $0x10] sm:$0xf]
      %v281 = vld [vmem:[%s275 + $0x14] sm:$0xf]
      %v282 = vld [vmem:[%s275 + $0x18] sm:$0xf]
      %v283 = vld [vmem:[%s275 + $0x1c] sm:$0xf]
      %v292 = vunpack.c.l.b16 %v276
      %v293 = vunpack.c.l.b16 %v277
      %v294 = vunpack.c.l.b16 %v278
      %v295 = vunpack.c.l.b16 %v279
      %v296 = vunpack.c.l.b16 %v280
      %v297 = vunpack.c.l.b16 %v281
      %v298 = vunpack.c.l.b16 %v282
      %v299 = vunpack.c.l.b16 %v283
      %v300 = vpack.c.b16 %v293, %v292
      %v301 = vpack.c.b16 %v295, %v294
      %v302 = vpack.c.b16 %v297, %v296
      %v303 = vpack.c.b16 %v299, %v298
      %v309 = vsel %vm229, %v274, 0
      %311 = vmatprep.subr.bf16.mxu0 0
      %312 = vmatpush1.bf16.msra.mxu0 %v300
      %313 = vmatprep.subr.bf16.mxu0 0
      %314 = vmatpush1.bf16.msra.mxu0 %v301
      %315 = vmatprep.subr.bf16.mxu0 0
      %316 = vmatpush1.bf16.msra.mxu0 %v302
      %317 = vmatprep.subr.bf16.mxu0 0
      %318 = vmatpush1.bf16.msra.mxu0 %v303
      %319 = vmatprep.subr.bf16.mxu0 0
      %320 = vmatpush1.bf16.msra.mxu0 0
      %321 = vmatprep.subr.bf16.mxu0 0
      %322 = vmatpush1.bf16.msra.mxu0 0
      %323 = vmatprep.subr.bf16.mxu0 0
      %324 = vmatpush1.bf16.msra.mxu0 0
      %325 = vmatprep.subr.bf16.mxu0 0
      %326 = vmatpush1.bf16.msra.mxu0 0
      %327 = vmatprep.subr.bf16.mxu0 0
      %328 = vmatpush1.bf16.msra.mxu0 0
      %329 = vmatprep.subr.bf16.mxu0 0
      %330 = vmatpush1.bf16.msra.mxu0 0
      %331 = vmatprep.subr.bf16.mxu0 0
      %332 = vmatpush1.bf16.msra.mxu0 0
      %333 = vmatprep.subr.bf16.mxu0 0
      %334 = vmatpush1.bf16.msra.mxu0 0
      %335 = vmatprep.subr.bf16.mxu0 0
      %336 = vmatpush1.bf16.msra.mxu0 0
      %337 = vmatprep.subr.bf16.mxu0 0
      %338 = vmatpush1.bf16.msra.mxu0 0
      %339 = vmatprep.subr.bf16.mxu0 0
      %340 = vmatpush1.bf16.msra.mxu0 0
      %341 = vmatprep.subr.bf16.mxu0 0
      %342 = vmatpush1.bf16.msra.mxu0 0
      %343 = vmatprep.mubr.bf16.mxu0 0
      %344 = vmatmul.mubr.bf16.gmra.mrb[0].mxu0 %v309
      %v345 = vpop.f32.mrb[0].mxu0
      %v346 = vadd.f32 0.0, %v345
      %v347 = vpop.f32.mrb[0].mxu0
      %v348 = vpop.f32.mrb[0].mxu0
      %v349 = vpop.f32.mrb[0].mxu0
      %350 = vdwg.mxu0
      %v351 = vmax.f32 %v346, 0.0
      %v352 = vpack.c.bf16 %v351, %v351
      %s353 = scalar_lea.vmem %s1, 96
      %v354 = vld [vmem:[%s353] sm:$0xf]
      %v355 = vld [vmem:[%s353 + $0x4] sm:$0xf]
      %v356 = vld [vmem:[%s353 + $0x8] sm:$0xf]
      %v357 = vld [vmem:[%s353 + $0xc] sm:$0xf]
      %v358 = vld [vmem:[%s353 + $0x10] sm:$0xf]
      %v359 = vld [vmem:[%s353 + $0x14] sm:$0xf]
      %v360 = vld [vmem:[%s353 + $0x18] sm:$0xf]
      %v361 = vld [vmem:[%s353 + $0x1c] sm:$0xf]
      %v370 = vunpack.c.l.b16 %v354
      %v371 = vunpack.c.l.b16 %v355
      %v372 = vunpack.c.l.b16 %v356
      %v373 = vunpack.c.l.b16 %v357
      %v374 = vunpack.c.l.b16 %v358
      %v375 = vunpack.c.l.b16 %v359
      %v376 = vunpack.c.l.b16 %v360
      %v377 = vunpack.c.l.b16 %v361
      %v378 = vpack.c.b16 %v371, %v370
      %v379 = vpack.c.b16 %v373, %v372
      %v380 = vpack.c.b16 %v375, %v374
      %v381 = vpack.c.b16 %v377, %v376
      %v387 = vsel %vm229, %v352, 0
      %389 = vmatprep.subr.bf16.mxu0 0
      %390 = vmatpush1.bf16.msra.mxu0 %v378
      %391 = vmatprep.subr.bf16.mxu0 0
      %392 = vmatpush1.bf16.msra.mxu0 %v379
      %393 = vmatprep.subr.bf16.mxu0 0
      %394 = vmatpush1.bf16.msra.mxu0 %v380
      %395 = vmatprep.subr.bf16.mxu0 0
      %396 = vmatpush1.bf16.msra.mxu0 %v381
      %397 = vmatprep.subr.bf16.mxu0 0
      %398 = vmatpush1.bf16.msra.mxu0 0
      %399 = vmatprep.subr.bf16.mxu0 0
      %400 = vmatpush1.bf16.msra.mxu0 0
      %401 = vmatprep.subr.bf16.mxu0 0
      %402 = vmatpush1.bf16.msra.mxu0 0
      %403 = vmatprep.subr.bf16.mxu0 0
      %404 = vmatpush1.bf16.msra.mxu0 0
      %405 = vmatprep.subr.bf16.mxu0 0
      %406 = vmatpush1.bf16.msra.mxu0 0
      %407 = vmatprep.subr.bf16.mxu0 0
      %408 = vmatpush1.bf16.msra.mxu0 0
      %409 = vmatprep.subr.bf16.mxu0 0
      %410 = vmatpush1.bf16.msra.mxu0 0
      %411 = vmatprep.subr.bf16.mxu0 0
      %412 = vmatpush1.bf16.msra.mxu0 0
      %413 = vmatprep.subr.bf16.mxu0 0
      %414 = vmatpush1.bf16.msra.mxu0 0
      %415 = vmatprep.subr.bf16.mxu0 0
      %416 = vmatpush1.bf16.msra.mxu0 0
      %417 = vmatprep.subr.bf16.mxu0 0
      %418 = vmatpush1.bf16.msra.mxu0 0
      %419 = vmatprep.subr.bf16.mxu0 0
      %420 = vmatpush1.bf16.msra.mxu0 0
      %421 = vmatprep.mubr.bf16.mxu0 0
      %422 = vmatmul.mubr.bf16.gmra.mrb[0].mxu0 %v387
      %v423 = vpop.f32.mrb[0].mxu0
      %v424 = vadd.f32 0.0, %v423
      %v425 = vpop.f32.mrb[0].mxu0
      %v426 = vpop.f32.mrb[0].mxu0
      %v427 = vpop.f32.mrb[0].mxu0
      %428 = vdwg.mxu0
      %v429 = vmax.f32 %v424, 0.0
      %v430 = vpack.c.bf16 %v429, %v429
      %s431 = scalar_lea.vmem %s1, 128
      %v432 = vld [vmem:[%s431] sm:$0xf]
      %v433 = vld [vmem:[%s431 + $0x4] sm:$0xf]
      %v434 = vld [vmem:[%s431 + $0x8] sm:$0xf]
      %v435 = vld [vmem:[%s431 + $0xc] sm:$0xf]
      %v436 = vld [vmem:[%s431 + $0x10] sm:$0xf]
      %v437 = vld [vmem:[%s431 + $0x14] sm:$0xf]
      %v438 = vld [vmem:[%s431 + $0x18] sm:$0xf]
      %v439 = vld [vmem:[%s431 + $0x1c] sm:$0xf]
      %v448 = vunpack.c.l.b16 %v432
      %v449 = vunpack.c.l.b16 %v433
      %v450 = vunpack.c.l.b16 %v434
      %v451 = vunpack.c.l.b16 %v435
      %v452 = vunpack.c.l.b16 %v436
      %v453 = vunpack.c.l.b16 %v437
      %v454 = vunpack.c.l.b16 %v438
      %v455 = vunpack.c.l.b16 %v439
      %v456 = vpack.c.b16 %v449, %v448
      %v457 = vpack.c.b16 %v451, %v450
      %v458 = vpack.c.b16 %v453, %v452
      %v459 = vpack.c.b16 %v455, %v454
      %v465 = vsel %vm229, %v430, 0
      %467 = vmatprep.subr.bf16.mxu0 0
      %468 = vmatpush1.bf16.msra.mxu0 %v456
      %469 = vmatprep.subr.bf16.mxu0 0
      %470 = vmatpush1.bf16.msra.mxu0 %v457
      %471 = vmatprep.subr.bf16.mxu0 0
      %472 = vmatpush1.bf16.msra.mxu0 %v458
      %473 = vmatprep.subr.bf16.mxu0 0
      %474 = vmatpush1.bf16.msra.mxu0 %v459
      %475 = vmatprep.subr.bf16.mxu0 0
      %476 = vmatpush1.bf16.msra.mxu0 0
      %477 = vmatprep.subr.bf16.mxu0 0
      %478 = vmatpush1.bf16.msra.mxu0 0
      %479 = vmatprep.subr.bf16.mxu0 0
      %480 = vmatpush1.bf16.msra.mxu0 0
      %481 = vmatprep.subr.bf16.mxu0 0
      %482 = vmatpush1.bf16.msra.mxu0 0
      %483 = vmatprep.subr.bf16.mxu0 0
      %484 = vmatpush1.bf16.msra.mxu0 0
      %485 = vmatprep.subr.bf16.mxu0 0
      %486 = vmatpush1.bf16.msra.mxu0 0
      %487 = vmatprep.subr.bf16.mxu0 0
      %488 = vmatpush1.bf16.msra.mxu0 0
      %489 = vmatprep.subr.bf16.mxu0 0
      %490 = vmatpush1.bf16.msra.mxu0 0
      %491 = vmatprep.subr.bf16.mxu0 0
      %492 = vmatpush1.bf16.msra.mxu0 0
      %493 = vmatprep.subr.bf16.mxu0 0
      %494 = vmatpush1.bf16.msra.mxu0 0
      %495 = vmatprep.subr.bf16.mxu0 0
      %496 = vmatpush1.bf16.msra.mxu0 0
      %497 = vmatprep.subr.bf16.mxu0 0
      %498 = vmatpush1.bf16.msra.mxu0 0
      %499 = vmatprep.mubr.bf16.mxu0 0
      %500 = vmatmul.mubr.bf16.gmra.mrb[0].mxu0 %v465
      %v501 = vpop.f32.mrb[0].mxu0
      %v502 = vadd.f32 0.0, %v501
      %v503 = vpop.f32.mrb[0].mxu0
      %v504 = vpop.f32.mrb[0].mxu0
      %v505 = vpop.f32.mrb[0].mxu0
      %506 = vdwg.mxu0
      %507 = vst.msk [vmem:[%s138] sm:$0xff] %vm150, %v502
      %p508 = scmp.lt.s32.totalorder %s13, 1
      %s509 = scalar_select %p508, %s13, 1
      %s510 = smul.addr %s509, 8
      %s511 = scalar_lea.vmem %s2, %s510
      // Predicated region
      $region29: #{_tarnet_pallas.1} parent=27 // pred_check
        %p512 = pneg %p78
      $region30: #{_tarnet_pallas.1} parent=27 // pred_check_branch
        %514 = sbr.rel (%p512) target = $region32
      $region31: #{_tarnet_pallas.1} parent=27 // pred_region
        _
      $region32: #{_tarnet_pallas.1} parent=27 // pred_fallthru
        _
    $region28: #{_tarnet_pallas.1} parent=5 // pred_fallthru
      _
    %p515 = scmp.le.s32.totalorder 2, %s8
    // Predicated region
    $region33: #{_tarnet_pallas.1} parent=5 // pred_check
      %p516 = pneg %p515
    $region34: #{_tarnet_pallas.1} parent=5 // pred_check_branch
      %518 = sbr.rel (%p516) target = $region36
    $region35: #{_tarnet_pallas.1} parent=5 // pred_region
      %s519 = ssub.s32 %s8, 2
      // Predicated region
      $region37: #{_tarnet_pallas.1} parent=35 // pred_check
        %p520 = pneg %p84
      $region38: #{_tarnet_pallas.1} parent=35 // pred_check_branch
        %522 = sbr.rel (%p520) target = $region40
      $region39: #{_tarnet_pallas.1} parent=35 // pred_region
        %p523 = scmp.lt.s32.totalorder %s14, 1
        %s524 = scalar_select %p523, %s14, 1
        %s525 = smul.addr %s524, 8
        %s526 = scalar_lea.vmem %s2, %s525
      $region40: #{_tarnet_pallas.1} parent=35 // pred_fallthru
        _
    $region36: #{_tarnet_pallas.1} parent=5 // pred_fallthru
      _
  $region6: #{_tarnet_pallas.1} parent=0 // loop_footer
    %s12 = sadd.s32 1, %s8
  $region7: #{_tarnet_pallas.1} parent=0 // loop_footer_branch
    %7 = sbr.rel target = $region3
  $region8: #{_tarnet_pallas.1} parent=0 // loop_exit
    _

</llo_original>
